<compile_context>
chip_gen: v5e
topology: v5e:2x2
jax: 0.10.0
libtpu: 0.0.40
codegen_flags: <defaults>
</compile_context>

<pallas_src>
import numpy as np
import jax
import jax.numpy as jnp
from jax import lax
from jax.experimental import pallas as pl
from jax.experimental.pallas import tpu as pltpu

BN_EPS = 1e-5


# ----------------------------- Pallas kernel --------------------------------
def basic_block_kernel(x_ref, b1c_ref, b2_ref, bn_ref, out_ref):
    """Fused BasicBlock forward for one stack of NB images (grid over batch blocks).

    x_ref   : (1, MP+2, W*Cin)      lane-dense input; NB zero-padded images stacked
                                    along rows, plus 1 leading halo row and tail pad
                                    up to MP (a multiple of 8) + 1 trailing halo row.
    b1c_ref : (3, W*Cin, 2*W*Cout)  bf16 banded conv1 weights | 1x1-shortcut weights
    b2_ref  : (3, W*Cout, W*Cout)   bf16 banded conv2 weights
    bn_ref  : (8, 2*W*Cout)         packed folded-BN rows:
                                    0: scale [branch1|short]  1: bias [branch1|short]
                                    2: scale branch2 (first W*Cout lanes)  3: bias branch2
    out_ref : (NB, H, W*Cout)       lane-dense output (W*Cout = 128 here)
    """
    nb, h, wco = out_ref.shape
    mp = x_ref.shape[1] - 2                     # stacked row count (multiple of 8)
    f32, bf16 = jnp.float32, jnp.bfloat16

    # Packed folded-BN rows (broadcast over the M rows below).
    sc1 = bn_ref[0:1, :]                        # (1, 2*WCo)  branch1 | shortcut scale
    bc1 = bn_ref[1:2, :]                        # (1, 2*WCo)  branch1 | shortcut bias
    s2 = bn_ref[2:3, 0:wco]                     # (1, WCo)    branch2 scale
    b2 = bn_ref[3:4, 0:wco]                     # (1, WCo)    branch2 bias

    x = x_ref[0]                                # (MP+2, W*Cin) f32

    # ---- branch1 (3x3 conv, pad 1) + fused 1x1 shortcut: 3 banded GEMMs over kh taps.
    #      bf16 MXU operands, f32 accumulation; BN math stays f32. -------------------
    acc1 = jnp.dot(x[0:mp, :].astype(bf16), b1c_ref[0], preferred_element_type=f32)
    acc1 += jnp.dot(x[1:mp + 1, :].astype(bf16), b1c_ref[1], preferred_element_type=f32)
    acc1 += jnp.dot(x[2:mp + 2, :].astype(bf16), b1c_ref[2], preferred_element_type=f32)
    acc1 = acc1 * sc1 + bc1                     # folded BN for both halves

    out1 = jnp.maximum(acc1[:, :wco], 0.0)      # branch1 post-BN+ReLU, (MP, WCo) f32
    short = acc1[:, wco:]                       # shortcut post-BN,     (MP, WCo) f32

    # ---- zero the per-image halo rows (and tail pad rows) so branch2 sees the correct
    #      H zero padding; w padding is already encoded in the banded weights. --------
    row = lax.broadcasted_iota(jnp.int32, (mp, 1), 0)
    interior = None
    for j in range(nb):                         # nb is small and static
        lo = j * (h + 2) + 1
        rng = jnp.logical_and(row >= lo, row < lo + h)
        interior = rng if interior is None else jnp.logical_or(interior, rng)
    out1p = jnp.where(interior, out1, 0.0)      # (MP, WCo) f32, halo rows = 0

    # ---- branch2 (3x3 conv, pad 1): +/-1-row shifted copies built in registers via
    #      XLU rolls (wrap rows land on already-zeroed halo/tail rows). ---------------
    o1u = pltpu.roll(out1p, 1, 0)               # o1u[r] = out1p[r-1]
    o1d = pltpu.roll(out1p, mp - 1, 0)          # o1d[r] = out1p[r+1]
    acc2 = jnp.dot(o1u.astype(bf16), b2_ref[0], preferred_element_type=f32)
    acc2 += jnp.dot(out1p.astype(bf16), b2_ref[1], preferred_element_type=f32)
    acc2 += jnp.dot(o1d.astype(bf16), b2_ref[2], preferred_element_type=f32)
    acc2 = acc2 * s2 + b2

    # ---- residual add + final ReLU; per-image full-lane (H, 128) stores --------------
    res = jnp.maximum(acc2 + short, 0.0)        # (MP, WCo) f32
    for j in range(nb):
        base = j * (h + 2) + 1
        out_ref[j] = res[base:base + h, :].astype(out_ref.dtype)


# --------------------------- weight / BN preparation -------------------------
def fold_bn(gamma, beta, mean, var):
    scale = gamma / jnp.sqrt(var + BN_EPS)
    bias = beta - mean * scale
    return scale.astype(jnp.float32), bias.astype(jnp.float32)


def _conv_band(w_kh, W):
    """Banded block-Toeplitz matrix for one kh row of a 3x3 conv with pad=1.

    w_kh: (3, C_in, C_out) taps (kw = 0, 1, 2).  Returns B (W*C_in, W*C_out) with
      B[(w + kw - 1)*C_in + ci, w*C_out + co] = w_kh[kw, ci, co]
    for in-range input columns; out-of-range taps (the w zero padding) are dropped.
    """
    out = None
    for kw in range(3):
        band = jnp.kron(jnp.eye(W, k=-(kw - 1), dtype=w_kh.dtype), w_kh[kw])
        out = band if out is None else out + band
    return out


def _pick_images_per_step(n, h, target_rows=256):
    """Largest divisor of n whose stacked row count stays near the target."""
    nb = 1
    for cand in range(1, n + 1):
        if n % cand == 0 and cand * (h + 2) <= target_rows:
            nb = cand
    return nb


# ------------------------------- wrapper -------------------------------------
@jax.jit
def basic_block_pallas(x_nchw, params):
    """x_nchw: (N, Cin, H, W) float32. Returns (N, Cout, H, W)."""
    (w1, g1, be1, m1, v1,
     w2, g2, be2, m2, v2,
     ws, gs, bes, ms, vs) = params

    N, Cin, H, W = x_nchw.shape
    Cout = w1.shape[-1]
    WCi, WCo = W * Cin, W * Cout

    NB = _pick_images_per_step(N, H)            # images stacked per grid step
    G = N // NB                                 # grid steps (several per core at scale)
    M = NB * (H + 2)
    MP = -(-M // 8) * 8                         # round up to a sublane multiple

    s1, b1 = fold_bn(g1, be1, m1, v1)
    s2, b2 = fold_bn(g2, be2, m2, v2)
    ss, bs = fold_bn(gs, bes, ms, vs)

    # Banded block-Toeplitz weights, cast once to bf16 (MXU operands); accumulation and
    # all BN / residual math stay f32 inside the kernel.
    B1 = jnp.stack([_conv_band(w1[kh], W) for kh in range(3)])          # (3, W*Cin, W*Cout)
    Bs = jnp.kron(jnp.eye(W, dtype=ws.dtype), ws)                       # (W*Cin, W*Cout) 1x1
    B1c = jnp.concatenate(
        [B1, jnp.stack([jnp.zeros_like(Bs), Bs, jnp.zeros_like(Bs)])], axis=-1
    ).astype(jnp.bfloat16)                                              # (3, W*Cin, 2*W*Cout)
    B2 = jnp.stack([_conv_band(w2[kh], W) for kh in range(3)]).astype(jnp.bfloat16)

    # Folded-BN scale/bias packed into one (8, 2*W*Cout) block (single DMA).
    bn_pack = jnp.zeros((8, 2 * WCo), jnp.float32)
    bn_pack = bn_pack.at[0].set(jnp.concatenate([jnp.tile(s1, W), jnp.tile(ss, W)]))
    bn_pack = bn_pack.at[1].set(jnp.concatenate([jnp.tile(b1, W), jnp.tile(bs, W)]))
    bn_pack = bn_pack.at[2, :WCo].set(jnp.tile(s2, W))
    bn_pack = bn_pack.at[3, :WCo].set(jnp.tile(b2, W))

    # NCHW -> lane-dense rows (lanes = (w, ci)); zero-pad each image by 1 row, stack NB
    # images per block along the M axis, then add 1 leading halo row and pad the tail
    # up to MP rows (+1 trailing halo row) for the three kh row-shifted views.
    x_lane = jnp.transpose(x_nchw, (0, 2, 3, 1)).astype(jnp.float32).reshape(N, H, WCi)
    x_lane = jnp.pad(x_lane, ((0, 0), (1, 1), (0, 0)))                  # (N, H+2, W*Cin)
    x_stack = x_lane.reshape(G, M, WCi)
    x_stack = jnp.pad(x_stack, ((0, 0), (1, 1 + MP - M), (0, 0)))       # (G, MP+2, W*Cin)

    out_flat = pl.pallas_call(
        basic_block_kernel,
        out_shape=jax.ShapeDtypeStruct((N, H, WCo), jnp.float32),
        grid_spec=pltpu.PrefetchScalarGridSpec(
            num_scalar_prefetch=0,
            grid=(G,),
            in_specs=[
                pl.BlockSpec((1, MP + 2, WCi), lambda g: (g, 0, 0)),    # stacked x
                pl.BlockSpec((3, WCi, 2 * WCo), lambda g: (0, 0, 0)),   # B1c | 1x1 short
                pl.BlockSpec((3, WCo, WCo), lambda g: (0, 0, 0)),       # B2
                pl.BlockSpec((8, 2 * WCo), lambda g: (0, 0)),           # packed BN
            ],
            out_specs=pl.BlockSpec((NB, H, WCo), lambda g: (g, 0, 0)),
        ),
        compiler_params=pltpu.CompilerParams(
            dimension_semantics=("parallel",)),
        # NOTE: at production ResNet sizes, add an H-row / W-column grid axis (so each
        # core gets >=4-8 steps), tile the banded weights to fit v7x's 64 MiB VMEM,
        # set vmem_limit_bytes accordingly, and mark the grid-invariant weight specs
        # with pipeline_mode=pl.Buffered(1) to drop their second buffer.
    )(x_stack, B1c, B2, bn_pack)

    return jnp.transpose(out_flat.reshape(N, H, W, Cout), (0, 3, 1, 2))


# ---------------------------- pure-JAX reference -----------------------------
def conv_bn_ref(x_nhwc, w_hwio, gamma, beta, mean, var, stride, pad, act):
    y = lax.conv_general_dilated(
        x_nhwc, w_hwio, (stride, stride), [(pad, pad), (pad, pad)],
        dimension_numbers=('NHWC', 'HWIO', 'NHWC'),
        precision=lax.Precision.HIGHEST)
    scale = gamma / jnp.sqrt(var + BN_EPS)
    y = y * scale + (beta - mean * scale)
    if act:
        y = jnp.maximum(y, 0.0)
    return y


@jax.jit
def basic_block_ref(x_nchw, params):
    (w1, g1, be1, m1, v1,
     w2, g2, be2, m2, v2,
     ws, gs, bes, ms, vs) = params
    x = jnp.transpose(x_nchw, (0, 2, 3, 1))
    out = conv_bn_ref(x, w1, g1, be1, m1, v1, 1, 1, True)       # branch1
    out = conv_bn_ref(out, w2, g2, be2, m2, v2, 1, 1, False)    # branch2
    short = conv_bn_ref(x, ws.reshape(1, 1, *ws.shape), gs, bes, ms, vs, 1, 0, False)
    out = jnp.maximum(out + short, 0.0)
    return jnp.transpose(out, (0, 3, 1, 2))


if __name__ == "__main__":
    N, Cin, Cout, H, W = 2, 4, 8, 16, 16

    key = jax.random.PRNGKey(0)
    ks = jax.random.split(key, 17)

    # deterministic synthetic parameters (shapes follow the PyTorch module)
    w1 = 0.1 * jax.random.normal(ks[0], (3, 3, Cin, Cout), jnp.float32)     # HWIO
    g1 = 1.0 + 0.1 * jax.random.normal(ks[1], (Cout,), jnp.float32)
    be1 = 0.1 * jax.random.normal(ks[2], (Cout,), jnp.float32)
    m1 = 0.1 * jax.random.normal(ks[3], (Cout,), jnp.float32)
    v1 = 0.5 + jnp.abs(jax.random.normal(ks[4], (Cout,), jnp.float32)) * 0.5

    w2 = 0.1 * jax.random.normal(ks[5], (3, 3, Cout, Cout), jnp.float32)    # HWIO
    g2 = 1.0 + 0.1 * jax.random.normal(ks[6], (Cout,), jnp.float32)
    be2 = 0.1 * jax.random.normal(ks[7], (Cout,), jnp.float32)
    m2 = 0.1 * jax.random.normal(ks[8], (Cout,), jnp.float32)
    v2 = 0.5 + jnp.abs(jax.random.normal(ks[9], (Cout,), jnp.float32)) * 0.5

    ws = 0.1 * jax.random.normal(ks[10], (Cin, Cout), jnp.float32)          # 1x1 conv
    gs = 1.0 + 0.1 * jax.random.normal(ks[11], (Cout,), jnp.float32)
    bes = 0.1 * jax.random.normal(ks[12], (Cout,), jnp.float32)
    ms = 0.1 * jax.random.normal(ks[13], (Cout,), jnp.float32)
    vs = 0.5 + jnp.abs(jax.random.normal(ks[14], (Cout,), jnp.float32)) * 0.5

    params = (w1, g1, be1, m1, v1, w2, g2, be2, m2, v2, ws, gs, bes, ms, vs)

    x = jax.random.normal(ks[15], (N, Cin, H, W), jnp.float32)   # NCHW, like PyTorch

    out = jax.block_until_ready(basic_block_pallas(x, params))
    ref = jax.block_until_ready(basic_block_ref(x, params))

    # Tolerance loosened vs. the pure-f32 version: the MXU operands are bf16 (f32
    # accumulation), so per-element deviations of a few 1e-3 are expected.
    np.testing.assert_allclose(np.asarray(out), np.asarray(ref), rtol=2e-2, atol=2e-2)
    print("KERNEL_OK")
</pallas_src>

<mosaic_0001>
module attributes {stable_mosaic.version = 11 : i64} {
  func.func @basic_block_kernel(%arg0: i32, %arg1: memref<1x42x64xf32, #tpu.memory_space<vmem>>, %arg2: memref<3x64x256xbf16, #tpu.memory_space<vmem>>, %arg3: memref<3x128x128xbf16, #tpu.memory_space<vmem>>, %arg4: memref<8x256xf32, #tpu.memory_space<vmem>>, %arg5: memref<2x16x128xf32, #tpu.memory_space<vmem>>) attributes {dimension_semantics = [#tpu.dimension_semantics<parallel>], iteration_bounds = array<i64: 1>, scalar_prefetch = 0 : i64, scratch_operands = 0 : i64, tpu.core_type = #tpu.core_type<tc>, window_params = [{transform_indices = @transform_0, window_bounds = array<i64: 1, 42, 64>}, {pipeline_mode = #tpu.pipeline_mode<synchronous>, transform_indices = @transform_1, window_bounds = array<i64: 3, 64, 256>}, {pipeline_mode = #tpu.pipeline_mode<synchronous>, transform_indices = @transform_2, window_bounds = array<i64: 3, 128, 128>}, {pipeline_mode = #tpu.pipeline_mode<synchronous>, transform_indices = @transform_3, window_bounds = array<i64: 8, 256>}, {transform_indices = @transform_4, window_bounds = array<i64: 2, 16, 128>}]} {
    %c0 = arith.constant 0 : index
    %c0_0 = arith.constant 0 : index
    %0 = vector.load %arg4[%c0, %c0_0] : memref<8x256xf32, #tpu.memory_space<vmem>>, vector<1x256xf32>
    %c1 = arith.constant 1 : index
    %c0_1 = arith.constant 0 : index
    %1 = vector.load %arg4[%c1, %c0_1] : memref<8x256xf32, #tpu.memory_space<vmem>>, vector<1x256xf32>
    %c2 = arith.constant 2 : index
    %c0_2 = arith.constant 0 : index
    %2 = vector.load %arg4[%c2, %c0_2] : memref<8x256xf32, #tpu.memory_space<vmem>>, vector<1x128xf32>
    %c3 = arith.constant 3 : index
    %c0_3 = arith.constant 0 : index
    %3 = vector.load %arg4[%c3, %c0_3] : memref<8x256xf32, #tpu.memory_space<vmem>>, vector<1x128xf32>
    %c0_4 = arith.constant 0 : index
    %c0_5 = arith.constant 0 : index
    %c0_6 = arith.constant 0 : index
    %4 = vector.load %arg1[%c0_4, %c0_5, %c0_6] : memref<1x42x64xf32, #tpu.memory_space<vmem>>, vector<1x42x64xf32>
    %5 = vector.shape_cast %4 : vector<1x42x64xf32> to vector<42x64xf32>
    %6 = vector.extract_strided_slice %5 {offsets = [0, 0], sizes = [40, 64], strides = [1, 1]} : vector<42x64xf32> to vector<40x64xf32>
    %7 = arith.truncf %6 : vector<40x64xf32> to vector<40x64xbf16>
    %c0_7 = arith.constant 0 : index
    %c0_8 = arith.constant 0 : index
    %c0_9 = arith.constant 0 : index
    %8 = vector.load %arg2[%c0_7, %c0_8, %c0_9] : memref<3x64x256xbf16, #tpu.memory_space<vmem>>, vector<1x64x256xbf16>
    %9 = vector.shape_cast %8 : vector<1x64x256xbf16> to vector<64x256xbf16>
    %cst = arith.constant dense<0.000000e+00> : vector<40x256xf32>
    %10 = tpu.matmul %7, %9, %cst {dimension_numbers = #tpu.dot_dimension_numbers<[1], [0], [0], [1], [0, 0, 1, 1], [], []>} : vector<40x64xbf16>, vector<64x256xbf16>, vector<40x256xf32> -> vector<40x256xf32>
    %11 = vector.extract_strided_slice %5 {offsets = [1, 0], sizes = [40, 64], strides = [1, 1]} : vector<42x64xf32> to vector<40x64xf32>
    %12 = arith.truncf %11 : vector<40x64xf32> to vector<40x64xbf16>
    %c1_10 = arith.constant 1 : index
    %c0_11 = arith.constant 0 : index
    %c0_12 = arith.constant 0 : index
    %13 = vector.load %arg2[%c1_10, %c0_11, %c0_12] : memref<3x64x256xbf16, #tpu.memory_space<vmem>>, vector<1x64x256xbf16>
    %14 = vector.shape_cast %13 : vector<1x64x256xbf16> to vector<64x256xbf16>
    %cst_13 = arith.constant dense<0.000000e+00> : vector<40x256xf32>
    %15 = tpu.matmul %12, %14, %cst_13 {dimension_numbers = #tpu.dot_dimension_numbers<[1], [0], [0], [1], [0, 0, 1, 1], [], []>} : vector<40x64xbf16>, vector<64x256xbf16>, vector<40x256xf32> -> vector<40x256xf32>
    %16 = arith.addf %10, %15 : vector<40x256xf32>
    %17 = vector.extract_strided_slice %5 {offsets = [2, 0], sizes = [40, 64], strides = [1, 1]} : vector<42x64xf32> to vector<40x64xf32>
    %18 = arith.truncf %17 : vector<40x64xf32> to vector<40x64xbf16>
    %c2_14 = arith.constant 2 : index
    %c0_15 = arith.constant 0 : index
    %c0_16 = arith.constant 0 : index
    %19 = vector.load %arg2[%c2_14, %c0_15, %c0_16] : memref<3x64x256xbf16, #tpu.memory_space<vmem>>, vector<1x64x256xbf16>
    %20 = vector.shape_cast %19 : vector<1x64x256xbf16> to vector<64x256xbf16>
    %cst_17 = arith.constant dense<0.000000e+00> : vector<40x256xf32>
    %21 = tpu.matmul %18, %20, %cst_17 {dimension_numbers = #tpu.dot_dimension_numbers<[1], [0], [0], [1], [0, 0, 1, 1], [], []>} : vector<40x64xbf16>, vector<64x256xbf16>, vector<40x256xf32> -> vector<40x256xf32>
    %22 = arith.addf %16, %21 : vector<40x256xf32>
    %23 = vector.broadcast %0 : vector<1x256xf32> to vector<40x256xf32>
    %24 = arith.mulf %22, %23 : vector<40x256xf32>
    %25 = vector.broadcast %1 : vector<1x256xf32> to vector<40x256xf32>
    %26 = arith.addf %24, %25 : vector<40x256xf32>
    %27 = vector.extract_strided_slice %26 {offsets = [0, 0], sizes = [40, 128], strides = [1, 1]} : vector<40x256xf32> to vector<40x128xf32>
    %cst_18 = arith.constant 0.000000e+00 : f32
    %28 = vector.broadcast %cst_18 : f32 to vector<40x128xf32>
    %29 = arith.maximumf %27, %28 : vector<40x128xf32>
    %30 = vector.extract_strided_slice %26 {offsets = [0, 128], sizes = [40, 128], strides = [1, 1]} : vector<40x256xf32> to vector<40x128xf32>
    %31 = tpu.iota {dimensions = array<i32: 0>} : vector<40x1xi32>
    %c1_i32 = arith.constant 1 : i32
    %32 = vector.broadcast %c1_i32 : i32 to vector<40x1xi32>
    %33 = arith.cmpi sge, %31, %32 : vector<40x1xi32>
    %c17_i32 = arith.constant 17 : i32
    %34 = vector.broadcast %c17_i32 : i32 to vector<40x1xi32>
    %35 = arith.cmpi slt, %31, %34 : vector<40x1xi32>
    %36 = arith.andi %33, %35 : vector<40x1xi1>
    %c19_i32 = arith.constant 19 : i32
    %37 = vector.broadcast %c19_i32 : i32 to vector<40x1xi32>
    %38 = arith.cmpi sge, %31, %37 : vector<40x1xi32>
    %c35_i32 = arith.constant 35 : i32
    %39 = vector.broadcast %c35_i32 : i32 to vector<40x1xi32>
    %40 = arith.cmpi slt, %31, %39 : vector<40x1xi32>
    %41 = arith.andi %38, %40 : vector<40x1xi1>
    %42 = arith.ori %36, %41 : vector<40x1xi1>
    %cst_19 = arith.constant 0.000000e+00 : f32
    %43 = vector.shape_cast %42 : vector<40x1xi1> to vector<40x1xi1>
    %44 = vector.broadcast %43 : vector<40x1xi1> to vector<40x128xi1>
    %45 = vector.broadcast %cst_19 : f32 to vector<40x128xf32>
    %46 = arith.select %44, %29, %45 : vector<40x128xi1>, vector<40x128xf32>
    %c1_i32_20 = arith.constant 1 : i32
    %47 = tpu.dynamic_rotate %46 by %c1_i32_20 dim 0 : vector<40x128xf32>, i32 -> vector<40x128xf32>
    %c39_i32 = arith.constant 39 : i32
    %48 = tpu.dynamic_rotate %46 by %c39_i32 dim 0 : vector<40x128xf32>, i32 -> vector<40x128xf32>
    %49 = arith.truncf %47 : vector<40x128xf32> to vector<40x128xbf16>
    %c0_21 = arith.constant 0 : index
    %c0_22 = arith.constant 0 : index
    %c0_23 = arith.constant 0 : index
    %50 = vector.load %arg3[%c0_21, %c0_22, %c0_23] : memref<3x128x128xbf16, #tpu.memory_space<vmem>>, vector<1x128x128xbf16>
    %51 = vector.shape_cast %50 : vector<1x128x128xbf16> to vector<128x128xbf16>
    %cst_24 = arith.constant dense<0.000000e+00> : vector<40x128xf32>
    %52 = tpu.matmul %49, %51, %cst_24 {dimension_numbers = #tpu.dot_dimension_numbers<[1], [0], [0], [1], [0, 0, 1, 1], [], []>} : vector<40x128xbf16>, vector<128x128xbf16>, vector<40x128xf32> -> vector<40x128xf32>
    %53 = arith.truncf %46 : vector<40x128xf32> to vector<40x128xbf16>
    %c1_25 = arith.constant 1 : index
    %c0_26 = arith.constant 0 : index
    %c0_27 = arith.constant 0 : index
    %54 = vector.load %arg3[%c1_25, %c0_26, %c0_27] : memref<3x128x128xbf16, #tpu.memory_space<vmem>>, vector<1x128x128xbf16>
    %55 = vector.shape_cast %54 : vector<1x128x128xbf16> to vector<128x128xbf16>
    %cst_28 = arith.constant dense<0.000000e+00> : vector<40x128xf32>
    %56 = tpu.matmul %53, %55, %cst_28 {dimension_numbers = #tpu.dot_dimension_numbers<[1], [0], [0], [1], [0, 0, 1, 1], [], []>} : vector<40x128xbf16>, vector<128x128xbf16>, vector<40x128xf32> -> vector<40x128xf32>
    %57 = arith.addf %52, %56 : vector<40x128xf32>
    %58 = arith.truncf %48 : vector<40x128xf32> to vector<40x128xbf16>
    %c2_29 = arith.constant 2 : index
    %c0_30 = arith.constant 0 : index
    %c0_31 = arith.constant 0 : index
    %59 = vector.load %arg3[%c2_29, %c0_30, %c0_31] : memref<3x128x128xbf16, #tpu.memory_space<vmem>>, vector<1x128x128xbf16>
    %60 = vector.shape_cast %59 : vector<1x128x128xbf16> to vector<128x128xbf16>
    %cst_32 = arith.constant dense<0.000000e+00> : vector<40x128xf32>
    %61 = tpu.matmul %58, %60, %cst_32 {dimension_numbers = #tpu.dot_dimension_numbers<[1], [0], [0], [1], [0, 0, 1, 1], [], []>} : vector<40x128xbf16>, vector<128x128xbf16>, vector<40x128xf32> -> vector<40x128xf32>
    %62 = arith.addf %57, %61 : vector<40x128xf32>
    %63 = vector.broadcast %2 : vector<1x128xf32> to vector<40x128xf32>
    %64 = arith.mulf %62, %63 : vector<40x128xf32>
    %65 = vector.broadcast %3 : vector<1x128xf32> to vector<40x128xf32>
    %66 = arith.addf %64, %65 : vector<40x128xf32>
    %67 = arith.addf %66, %30 : vector<40x128xf32>
    %cst_33 = arith.constant 0.000000e+00 : f32
    %68 = vector.broadcast %cst_33 : f32 to vector<40x128xf32>
    %69 = arith.maximumf %67, %68 : vector<40x128xf32>
    %70 = vector.extract_strided_slice %69 {offsets = [1, 0], sizes = [16, 128], strides = [1, 1]} : vector<40x128xf32> to vector<16x128xf32>
    %c0_34 = arith.constant 0 : index
    %c0_35 = arith.constant 0 : index
    %c0_36 = arith.constant 0 : index
    %71 = vector.load %arg5[%c0_34, %c0_35, %c0_36] : memref<2x16x128xf32, #tpu.memory_space<vmem>>, vector<1x16x128xf32>
    %72 = vector.shape_cast %71 : vector<1x16x128xf32> to vector<16x128xf32>
    %73 = vector.shape_cast %70 : vector<16x128xf32> to vector<1x16x128xf32>
    tpu.vector_store %arg5[%c0_34, %c0_35, %c0_36], %73 {strides = array<i32>} : memref<2x16x128xf32, #tpu.memory_space<vmem>>, vector<1x16x128xf32>,
    %74 = vector.extract_strided_slice %69 {offsets = [19, 0], sizes = [16, 128], strides = [1, 1]} : vector<40x128xf32> to vector<16x128xf32>
    %c1_37 = arith.constant 1 : index
    %c0_38 = arith.constant 0 : index
    %c0_39 = arith.constant 0 : index
    %75 = vector.load %arg5[%c1_37, %c0_38, %c0_39] : memref<2x16x128xf32, #tpu.memory_space<vmem>>, vector<1x16x128xf32>
    %76 = vector.shape_cast %75 : vector<1x16x128xf32> to vector<16x128xf32>
    %77 = vector.shape_cast %74 : vector<16x128xf32> to vector<1x16x128xf32>
    tpu.vector_store %arg5[%c1_37, %c0_38, %c0_39], %77 {strides = array<i32>} : memref<2x16x128xf32, #tpu.memory_space<vmem>>, vector<1x16x128xf32>,
    return
  }
  func.func @transform_0(%arg0: i32) -> (i32, i32, i32) {
    %c0_i32 = arith.constant 0 : i32
    %c0_i32_0 = arith.constant 0 : i32
    %c0_i32_1 = arith.constant 0 : i32
    return %arg0, %c0_i32, %c0_i32_0 : i32, i32, i32
  }
  func.func @transform_1(%arg0: i32) -> (i32, i32, i32) {
    %c0_i32 = arith.constant 0 : i32
    %c0_i32_0 = arith.constant 0 : i32
    %c0_i32_1 = arith.constant 0 : i32
    %c0_i32_2 = arith.constant 0 : i32
    return %c0_i32, %c0_i32_0, %c0_i32_1 : i32, i32, i32
  }
  func.func @transform_2(%arg0: i32) -> (i32, i32, i32) {
    %c0_i32 = arith.constant 0 : i32
    %c0_i32_0 = arith.constant 0 : i32
    %c0_i32_1 = arith.constant 0 : i32
    %c0_i32_2 = arith.constant 0 : i32
    return %c0_i32, %c0_i32_0, %c0_i32_1 : i32, i32, i32
  }
  func.func @transform_3(%arg0: i32) -> (i32, i32) {
    %c0_i32 = arith.constant 0 : i32
    %c0_i32_0 = arith.constant 0 : i32
    %c0_i32_1 = arith.constant 0 : i32
    return %c0_i32, %c0_i32_0 : i32, i32
  }
  func.func @transform_4(%arg0: i32) -> (i32, i32, i32) {
    %c0_i32 = arith.constant 0 : i32
    %c0_i32_0 = arith.constant 0 : i32
    %c0_i32_1 = arith.constant 0 : i32
    return %arg0, %c0_i32, %c0_i32_0 : i32, i32, i32
  }
}

</mosaic_0001>

<llo_original>
// kernel: tile.33
$region0: #{tile.33}
  #allocation0 [shape = 's32[1]{0}', space=sflag, size = 0x4, scoped, tag = 'scoped memory for tile.33']
  %s0 = inlined_call_operand.vmem [shape: f32[8], index: 0, kind: input, shape index: {}]
  %s1 = inlined_call_operand.vmem [shape: f32[16,8], index: 1, kind: output, shape index: {}]
  // Predicated region
  $region2: #{tile.33} parent=0 // pred_check
    _
  $region3: #{tile.33} parent=0 // pred_check_branch
    %3 = sbr.rel (0) target = $region5
  $region4: #{tile.33} parent=0 // pred_region
    _
  $region5: #{tile.33} parent=0 // pred_fallthru
    _
  %v4 = vld [vmem:[%s0] ss:$0 sm:$0xff]
  %5 = vst [vmem:[%s1] sm:$0xff] %v4
  %s6 = scalar_lea.vmem %s1, 8
  %7 = vst [vmem:[%s6] sm:$0xff] %v4

// kernel: tile.34
$region0: #{tile.34}
  %s0 = inlined_call_operand.vmem [shape: f32[16,8], index: 0, kind: input, shape index: {}]
  %s1 = inlined_call_operand.vmem [shape: f32[128], index: 1, kind: output, shape index: {}]
  $region1: #{tile.34} parent=0
    #allocation0 [shape = 'u8[4096]{0}', space=vmem, size = 0x1000, scoped, tag = 'scoped mem for output reshape']
    %v2 = vld [vmem:[%s0] sm:$0x1]
    %vm3 = vcmask 64512
    %4 = vst.msk [vmem:[#allocation0] sm:$0x1] %vm3, %v2
    %s5 = scalar_lea.vmem %s0, 15
    %v6 = vld [vmem:[%s5] sm:$0x1]
    %7 = vrot.lane.b32.xlu0 %v6, 120
    %v8 = vpop.permute.xlu0 %7
    %vm9 = vcmask 1048512
    %10 = vst.msk [vmem:[#allocation0] sm:$0x1] %vm9, %v8
    %s11 = scalar_lea.vmem %s0, 14
    %v12 = vld [vmem:[%s11] sm:$0x1]
    %13 = vrot.lane.b32.xlu0 %v12, 112
    %v14 = vpop.permute.xlu0 %13
    %vm15 = vcmask 982912
    %16 = vst.msk [vmem:[#allocation0] sm:$0x1] %vm15, %v14
    %s17 = scalar_lea.vmem %s0, 13
    %v18 = vld [vmem:[%s17] sm:$0x1]
    %19 = vrot.lane.b32.xlu0 %v18, 104
    %v20 = vpop.permute.xlu0 %19
    %vm21 = vcmask 917312
    %22 = vst.msk [vmem:[#allocation0] sm:$0x1] %vm21, %v20
    %s23 = scalar_lea.vmem %s0, 12
    %v24 = vld [vmem:[%s23] sm:$0x1]
    %25 = vrot.lane.b32.xlu0 %v24, 96
    %v26 = vpop.permute.xlu0 %25
    %vm27 = vcmask 851712
    %28 = vst.msk [vmem:[#allocation0] sm:$0x1] %vm27, %v26
    %s29 = scalar_lea.vmem %s0, 11
    %v30 = vld [vmem:[%s29] sm:$0x1]
    %31 = vrot.lane.b32.xlu0 %v30, 88
    %v32 = vpop.permute.xlu0 %31
    %vm33 = vcmask 786112
    %34 = vst.msk [vmem:[#allocation0] sm:$0x1] %vm33, %v32
    %s35 = scalar_lea.vmem %s0, 10
    %v36 = vld [vmem:[%s35] sm:$0x1]
    %37 = vrot.lane.b32.xlu0 %v36, 80
    %v38 = vpop.permute.xlu0 %37
    %vm39 = vcmask 720512
    %40 = vst.msk [vmem:[#allocation0] sm:$0x1] %vm39, %v38
    %s41 = scalar_lea.vmem %s0, 9
    %v42 = vld [vmem:[%s41] sm:$0x1]
    %43 = vrot.lane.b32.xlu0 %v42, 72
    %v44 = vpop.permute.xlu0 %43
    %vm45 = vcmask 654912
    %46 = vst.msk [vmem:[#allocation0] sm:$0x1] %vm45, %v44
    %s47 = scalar_lea.vmem %s0, 8
    %v48 = vld [vmem:[%s47] sm:$0x1]
    %49 = vrot.lane.b32.xlu0 %v48, 64
    %v50 = vpop.permute.xlu0 %49
    %vm51 = vcmask 589312
    %52 = vst.msk [vmem:[#allocation0] sm:$0x1] %vm51, %v50
    %s53 = scalar_lea.vmem %s0, 7
    %v54 = vld [vmem:[%s53] sm:$0x1]
    %55 = vrot.lane.b32.xlu0 %v54, 56
    %v56 = vpop.permute.xlu0 %55
    %vm57 = vcmask 523712
    %58 = vst.msk [vmem:[#allocation0] sm:$0x1] %vm57, %v56
    %s59 = scalar_lea.vmem %s0, 6
    %v60 = vld [vmem:[%s59] sm:$0x1]
    %61 = vrot.lane.b32.xlu0 %v60, 48
    %v62 = vpop.permute.xlu0 %61
    %vm63 = vcmask 458112
    %64 = vst.msk [vmem:[#allocation0] sm:$0x1] %vm63, %v62
    %s65 = scalar_lea.vmem %s0, 5
    %v66 = vld [vmem:[%s65] sm:$0x1]
    %67 = vrot.lane.b32.xlu0 %v66, 40
    %v68 = vpop.permute.xlu0 %67
    %vm69 = vcmask 392512
    %70 = vst.msk [vmem:[#allocation0] sm:$0x1] %vm69, %v68
    %s71 = scalar_lea.vmem %s0, 4
    %v72 = vld [vmem:[%s71] sm:$0x1]
    %73 = vrot.lane.b32.xlu0 %v72, 32
    %v74 = vpop.permute.xlu0 %73
    %vm75 = vcmask 326912
    %76 = vst.msk [vmem:[#allocation0] sm:$0x1] %vm75, %v74
    %s77 = scalar_lea.vmem %s0, 3
    %v78 = vld [vmem:[%s77] sm:$0x1]
    %79 = vrot.lane.b32.xlu0 %v78, 24
    %v80 = vpop.permute.xlu0 %79
    %vm81 = vcmask 261312
    %82 = vst.msk [vmem:[#allocation0] sm:$0x1] %vm81, %v80
    %s83 = scalar_lea.vmem %s0, 2
    %v84 = vld [vmem:[%s83] sm:$0x1]
    %85 = vrot.lane.b32.xlu0 %v84, 16
    %v86 = vpop.permute.xlu0 %85
    %vm87 = vcmask 195712
    %88 = vst.msk [vmem:[#allocation0] sm:$0x1] %vm87, %v86
    %s89 = scalar_lea.vmem %s0, 1
    %v90 = vld [vmem:[%s89] sm:$0x1]
    %91 = vrot.lane.b32.xlu0 %v90, 8
    %v92 = vpop.permute.xlu0 %91
    %vm93 = vcmask 130112
    %94 = vst.msk [vmem:[#allocation0] sm:$0x1] %vm93, %v92
    %s96 = ssub.s32 2, 1
    %v97 = vld [vmem:[#allocation0] sm:%s96]
    %s99 = ssub.s32 2, 1
    %100 = vst [vmem:[%s1] sm:%s99] %v97

// kernel: basic_block_pallas.1
$region0: #{basic_block_pallas.1}
  #allocation0 [shape = 'u32[]', space=smem, size = 0x4, offset = 0x4, fixed_abs, tag = 'smem constant byte address 0x4 - core index']
  #allocation1 [shape = 'u32[72,128]{1,0:T(1,128)}', space=vmem, size = 0x9000, scoped, tag = 'internal scratch']
  %s0 = inlined_call_operand.vmem [shape: f32[1,42,64], index: 0, kind: input, shape index: {}]
  %s1 = inlined_call_operand.vmem [shape: bf16[3,64,256], index: 1, kind: input, shape index: {}]
  %s2 = inlined_call_operand.vmem [shape: bf16[3,128,128], index: 2, kind: input, shape index: {}]
  %s3 = inlined_call_operand.vmem [shape: f32[8,256], index: 3, kind: input, shape index: {}]
  %s4 = inlined_call_operand.vmem [shape: f32[2,16,128], index: 4, kind: output, shape index: {}]
  %s5 = sld [smem:[#allocation0]]
  $region26: #{basic_block_pallas.1} parent=0
    _
  %s7 = ssub.s32 1, %s5
  %s8 = scalar_select 0, %s7, %s5
  // Predicated region
  $region2: #{basic_block_pallas.1} parent=0 // pred_check
    _
  $region3: #{basic_block_pallas.1} parent=0 // pred_check_branch
    %10 = sbr.rel (0) target = $region5
  $region4: #{basic_block_pallas.1} parent=0 // pred_region
    _
  $region5: #{basic_block_pallas.1} parent=0 // pred_fallthru
    _
  // Predicated region
  $region6: #{basic_block_pallas.1} parent=0 // pred_check
    _
  $region7: #{basic_block_pallas.1} parent=0 // pred_check_branch
    %12 = sbr.rel (0) target = $region9
  $region8: #{basic_block_pallas.1} parent=0 // pred_region
    _
  $region9: #{basic_block_pallas.1} parent=0 // pred_fallthru
    _
  // Predicated region
  $region10: #{basic_block_pallas.1} parent=0 // pred_check
    _
  $region11: #{basic_block_pallas.1} parent=0 // pred_check_branch
    %14 = sbr.rel (0) target = $region13
  $region12: #{basic_block_pallas.1} parent=0 // pred_region
    _
  $region13: #{basic_block_pallas.1} parent=0 // pred_fallthru
    _
  // Predicated region
  $region14: #{basic_block_pallas.1} parent=0 // pred_check
    _
  $region15: #{basic_block_pallas.1} parent=0 // pred_check_branch
    %16 = sbr.rel (0) target = $region17
  $region16: #{basic_block_pallas.1} parent=0 // pred_region
    _
  $region17: #{basic_block_pallas.1} parent=0 // pred_fallthru
    _
  %v18 = vld [vmem:[%s3] ss:$8 sm:$0x3]
  %s19 = scalar_lea.vmem %s3, 1
  %v20 = vld [vmem:[%s19] ss:$8 sm:$0x3]
  %v21 = vld [vmem:[%s3 + $0x2] ss:$0 sm:$0xff]
  %v22 = vld [vmem:[%s3 + $0x3] ss:$0 sm:$0xff]
  %v23 = vld [vmem:[%s0] sm:$0xff]
  %v24 = vld [vmem:[%s0 + $0x8] sm:$0xff]
  %v25 = vld [vmem:[%s0 + $0x10] sm:$0xff]
  %v26 = vld [vmem:[%s0 + $0x18] sm:$0xff]
  %v27 = vld [vmem:[%s0 + $0x20] sm:$0xff]
  %v28 = vld [vmem:[%s0 + $0x28] sm:$0x3]
  %v29 = vpack.c.bf16 %v24, %v23
  %v30 = vpack.c.bf16 %v26, %v25
  %v31 = vpack.c.bf16 %v27, %v27
  %v32 = vld [vmem:[%s1] sm:$0xff]
  %v33 = vld [vmem:[%s1 + $0x8] sm:$0xff]
  %v34 = vld [vmem:[%s1 + $0x10] sm:$0xff]
  %v35 = vld [vmem:[%s1 + $0x18] sm:$0xff]
  %v36 = vld [vmem:[%s1 + $0x20] sm:$0xff]
  %v37 = vld [vmem:[%s1 + $0x28] sm:$0xff]
  %v38 = vld [vmem:[%s1 + $0x30] sm:$0xff]
  %v39 = vld [vmem:[%s1 + $0x38] sm:$0xff]
  %v40 = vpack.c.bf16 %v28, %v27
  %s41 = scalar_lea.vmem %s1, 64
  %v42 = vld [vmem:[%s41] sm:$0xff]
  %v43 = vld [vmem:[%s41 + $0x8] sm:$0xff]
  %v44 = vld [vmem:[%s41 + $0x10] sm:$0xff]
  %v45 = vld [vmem:[%s41 + $0x18] sm:$0xff]
  %v46 = vld [vmem:[%s41 + $0x20] sm:$0xff]
  %v47 = vld [vmem:[%s41 + $0x28] sm:$0xff]
  %v48 = vld [vmem:[%s41 + $0x30] sm:$0xff]
  %v49 = vld [vmem:[%s41 + $0x38] sm:$0xff]
  %vm50 = vsmask.f32 7424
  %v52 = vshrl.u32 %v29, 16
  %v54 = vshll.u32 %v29, 16
  %v56 = vrot.slane %v54, 1
  %v57 = vor.u32 %v52, %v56
  %v59 = vshll.u32 %v30, 16
  %v61 = vrot.slane %v59, 1
  %v62 = vsel %vm50, %v57, %v61
  %v63 = vshrl.u32 %v30, 16
  %v65 = vor.u32 %v63, %v61
  %v67 = vshll.u32 %v40, 16
  %v69 = vrot.slane %v67, 1
  %v70 = vsel %vm50, %v65, %v69
  %v71 = vshrl.u32 %v40, 16
  %v73 = vor.u32 %v71, %v69
  %v82 = vunpack.c.l.b16 %v42
  %v83 = vunpack.c.h.b16 %v42
  %v84 = vunpack.c.l.b16 %v43
  %v85 = vunpack.c.h.b16 %v43
  %v86 = vunpack.c.l.b16 %v44
  %v87 = vunpack.c.h.b16 %v44
  %v88 = vunpack.c.l.b16 %v45
  %v89 = vunpack.c.h.b16 %v45
  %v90 = vunpack.c.l.b16 %v46
  %v91 = vunpack.c.h.b16 %v46
  %v92 = vunpack.c.l.b16 %v47
  %v93 = vunpack.c.h.b16 %v47
  %v94 = vunpack.c.l.b16 %v48
  %v95 = vunpack.c.h.b16 %v48
  %v96 = vunpack.c.l.b16 %v49
  %v97 = vunpack.c.h.b16 %v49
  %v98 = vpack.c.b16 %v84, %v82
  %v99 = vpack.c.b16 %v85, %v83
  %v100 = vpack.c.b16 %v88, %v86
  %v101 = vpack.c.b16 %v89, %v87
  %v102 = vpack.c.b16 %v92, %v90
  %v103 = vpack.c.b16 %v93, %v91
  %v104 = vpack.c.b16 %v96, %v94
  %v105 = vpack.c.b16 %v97, %v95
  %vm114 = vcmask 523264
  %v116 = vsel %vm114, %v62, 0
  %v119 = vsel %vm114, %v70, 0
  %v122 = vsel %vm114, %v73, 0
  %124 = vmatpush.bf16.msra.mxu0 0
  %125 = vmatpush.bf16.msra.mxu0 0
  %126 = vmatpush.bf16.msra.mxu0 0
  %127 = vmatpush.bf16.msra.mxu0 0
  %128 = vmatpush.bf16.msra.mxu0 %v104
  %129 = vmatpush.bf16.msra.mxu0 %v102
  %130 = vmatpush.bf16.msra.mxu0 %v100
  %131 = vmatpush.bf16.msra.mxu0 %v98
  %132 = vmatmul.bf16.gmra.mxu0 %v116
  %v133 = vpop.f32.mrf.mxu0
  %v134 = vadd.f32 0.0, %v133
  %v135 = vpop.f32.mrf.mxu0
  %v136 = vadd.f32 0.0, %v135
  %137 = vmatmul.bf16.gmra.mxu0 %v119
  %v138 = vpop.f32.mrf.mxu0
  %v139 = vadd.f32 0.0, %v138
  %v140 = vpop.f32.mrf.mxu0
  %v141 = vadd.f32 0.0, %v140
  %142 = vmatmul.bf16.gmra.mxu0 %v122
  %v143 = vpop.f32.mrf.mxu0
  %v144 = vadd.f32 0.0, %v143
  %v145 = vpop.f32.mrf.mxu0
  %146 = vdwg.mxu0
  %147 = vmatpush.bf16.msra.mxu0 0
  %148 = vmatpush.bf16.msra.mxu0 0
  %149 = vmatpush.bf16.msra.mxu0 0
  %150 = vmatpush.bf16.msra.mxu0 0
  %151 = vmatpush.bf16.msra.mxu0 %v105
  %152 = vmatpush.bf16.msra.mxu0 %v103
  %153 = vmatpush.bf16.msra.mxu0 %v101
  %154 = vmatpush.bf16.msra.mxu0 %v99
  %155 = vmatmul.bf16.gmra.mxu0 %v116
  %v156 = vpop.f32.mrf.mxu0
  %v157 = vadd.f32 0.0, %v156
  %v158 = vpop.f32.mrf.mxu0
  %v159 = vadd.f32 0.0, %v158
  %160 = vmatmul.bf16.gmra.mxu0 %v119
  %v161 = vpop.f32.mrf.mxu0
  %v162 = vadd.f32 0.0, %v161
  %v163 = vpop.f32.mrf.mxu0
  %v164 = vadd.f32 0.0, %v163
  %165 = vmatmul.bf16.gmra.mxu0 %v122
  %v166 = vpop.f32.mrf.mxu0
  %v167 = vadd.f32 0.0, %v166
  %v168 = vpop.f32.mrf.mxu0
  %169 = vdwg.mxu0
  %v178 = vunpack.c.l.b16 %v32
  %v179 = vunpack.c.h.b16 %v32
  %v180 = vunpack.c.l.b16 %v33
  %v181 = vunpack.c.h.b16 %v33
  %v182 = vunpack.c.l.b16 %v34
  %v183 = vunpack.c.h.b16 %v34
  %v184 = vunpack.c.l.b16 %v35
  %v185 = vunpack.c.h.b16 %v35
  %v186 = vunpack.c.l.b16 %v36
  %v187 = vunpack.c.h.b16 %v36
  %v188 = vunpack.c.l.b16 %v37
  %v189 = vunpack.c.h.b16 %v37
  %v190 = vunpack.c.l.b16 %v38
  %v191 = vunpack.c.h.b16 %v38
  %v192 = vunpack.c.l.b16 %v39
  %v193 = vunpack.c.h.b16 %v39
  %v194 = vpack.c.b16 %v180, %v178
  %v195 = vpack.c.b16 %v181, %v179
  %v196 = vpack.c.b16 %v184, %v182
  %v197 = vpack.c.b16 %v185, %v183
  %v198 = vpack.c.b16 %v188, %v186
  %v199 = vpack.c.b16 %v189, %v187
  %v200 = vpack.c.b16 %v192, %v190
  %v201 = vpack.c.b16 %v193, %v191
  %v210 = vsel %vm114, %v29, 0
  %v212 = vsel %vm114, %v30, 0
  %v215 = vsel %vm114, %v31, 0
  %217 = vmatpush.bf16.msra.mxu0 0
  %218 = vmatpush.bf16.msra.mxu0 0
  %219 = vmatpush.bf16.msra.mxu0 0
  %220 = vmatpush.bf16.msra.mxu0 0
  %221 = vmatpush.bf16.msra.mxu0 %v200
  %222 = vmatpush.bf16.msra.mxu0 %v198
  %223 = vmatpush.bf16.msra.mxu0 %v196
  %224 = vmatpush.bf16.msra.mxu0 %v194
  %225 = vmatmul.bf16.gmra.mxu0 %v210
  %v226 = vpop.f32.mrf.mxu0
  %v227 = vadd.f32 %v134, %v226
  %v228 = vpop.f32.mrf.mxu0
  %v229 = vadd.f32 %v136, %v228
  %230 = vmatmul.bf16.gmra.mxu0 %v212
  %v231 = vpop.f32.mrf.mxu0
  %v232 = vadd.f32 %v139, %v231
  %v233 = vpop.f32.mrf.mxu0
  %v234 = vadd.f32 %v141, %v233
  %235 = vmatmul.bf16.gmra.mxu0 %v215
  %v236 = vpop.f32.mrf.mxu0
  %v237 = vadd.f32 %v144, %v236
  %v238 = vpop.f32.mrf.mxu0
  %239 = vdwg.mxu0
  %240 = vmatpush.bf16.msra.mxu0 0
  %241 = vmatpush.bf16.msra.mxu0 0
  %242 = vmatpush.bf16.msra.mxu0 0
  %243 = vmatpush.bf16.msra.mxu0 0
  %244 = vmatpush.bf16.msra.mxu0 %v201
  %245 = vmatpush.bf16.msra.mxu0 %v199
  %246 = vmatpush.bf16.msra.mxu0 %v197
  %247 = vmatpush.bf16.msra.mxu0 %v195
  %248 = vmatmul.bf16.gmra.mxu0 %v210
  %v249 = vpop.f32.mrf.mxu0
  %v250 = vadd.f32 %v157, %v249
  %v251 = vpop.f32.mrf.mxu0
  %v252 = vadd.f32 %v159, %v251
  %253 = vmatmul.bf16.gmra.mxu0 %v212
  %v254 = vpop.f32.mrf.mxu0
  %v255 = vadd.f32 %v162, %v254
  %v256 = vpop.f32.mrf.mxu0
  %v257 = vadd.f32 %v164, %v256
  %258 = vmatmul.bf16.gmra.mxu0 %v215
  %v259 = vpop.f32.mrf.mxu0
  %v260 = vadd.f32 %v167, %v259
  %v261 = vpop.f32.mrf.mxu0
  %262 = vdwg.mxu0
  %s263 = scalar_lea.vmem %s1, 128
  %v264 = vld [vmem:[%s263] sm:$0xff]
  %v265 = vld [vmem:[%s263 + $0x8] sm:$0xff]
  %v266 = vld [vmem:[%s263 + $0x10] sm:$0xff]
  %v267 = vld [vmem:[%s263 + $0x18] sm:$0xff]
  %v268 = vld [vmem:[%s263 + $0x20] sm:$0xff]
  %v269 = vld [vmem:[%s263 + $0x28] sm:$0xff]
  %v270 = vld [vmem:[%s263 + $0x30] sm:$0xff]
  %v271 = vld [vmem:[%s263 + $0x38] sm:$0xff]
  %vm275 = vcmask 1046528
  %v276 = vrot.slane %v29, 1
  %v277 = vrot.slane %v30, 1
  %v278 = vsel %vm275, %v276, %v277
  %v279 = vrot.slane %v40, 1
  %v280 = vsel %vm275, %v277, %v279
  %v289 = vunpack.c.l.b16 %v264
  %v290 = vunpack.c.h.b16 %v264
  %v291 = vunpack.c.l.b16 %v265
  %v292 = vunpack.c.h.b16 %v265
  %v293 = vunpack.c.l.b16 %v266
  %v294 = vunpack.c.h.b16 %v266
  %v295 = vunpack.c.l.b16 %v267
  %v296 = vunpack.c.h.b16 %v267
  %v297 = vunpack.c.l.b16 %v268
  %v298 = vunpack.c.h.b16 %v268
  %v299 = vunpack.c.l.b16 %v269
  %v300 = vunpack.c.h.b16 %v269
  %v301 = vunpack.c.l.b16 %v270
  %v302 = vunpack.c.h.b16 %v270
  %v303 = vunpack.c.l.b16 %v271
  %v304 = vunpack.c.h.b16 %v271
  %v305 = vpack.c.b16 %v291, %v289
  %v306 = vpack.c.b16 %v292, %v290
  %v307 = vpack.c.b16 %v295, %v293
  %v308 = vpack.c.b16 %v296, %v294
  %v309 = vpack.c.b16 %v299, %v297
  %v310 = vpack.c.b16 %v300, %v298
  %v311 = vpack.c.b16 %v303, %v301
  %v312 = vpack.c.b16 %v304, %v302
  %v322 = vsel %vm114, %v278, 0
  %v325 = vsel %vm114, %v280, 0
  %v328 = vsel %vm114, %v279, 0
  %330 = vmatpush.bf16.msra.mxu0 0
  %331 = vmatpush.bf16.msra.mxu0 0
  %332 = vmatpush.bf16.msra.mxu0 0
  %333 = vmatpush.bf16.msra.mxu0 0
  %334 = vmatpush.bf16.msra.mxu0 %v311
  %335 = vmatpush.bf16.msra.mxu0 %v309
  %336 = vmatpush.bf16.msra.mxu0 %v307
  %337 = vmatpush.bf16.msra.mxu0 %v305
  %338 = vmatmul.bf16.gmra.mxu0 %v322
  %v339 = vpop.f32.mrf.mxu0
  %v340 = vadd.f32 0.0, %v339
  %v341 = vpop.f32.mrf.mxu0
  %v342 = vadd.f32 0.0, %v341
  %343 = vmatmul.bf16.gmra.mxu0 %v325
  %v344 = vpop.f32.mrf.mxu0
  %v345 = vadd.f32 0.0, %v344
  %v346 = vpop.f32.mrf.mxu0
  %v347 = vadd.f32 0.0, %v346
  %348 = vmatmul.bf16.gmra.mxu0 %v328
  %v349 = vpop.f32.mrf.mxu0
  %v350 = vadd.f32 0.0, %v349
  %v351 = vpop.f32.mrf.mxu0
  %352 = vdwg.mxu0
  %353 = vmatpush.bf16.msra.mxu0 0
  %354 = vmatpush.bf16.msra.mxu0 0
  %355 = vmatpush.bf16.msra.mxu0 0
  %356 = vmatpush.bf16.msra.mxu0 0
  %357 = vmatpush.bf16.msra.mxu0 %v312
  %358 = vmatpush.bf16.msra.mxu0 %v310
  %359 = vmatpush.bf16.msra.mxu0 %v308
  %360 = vmatpush.bf16.msra.mxu0 %v306
  %361 = vmatmul.bf16.gmra.mxu0 %v322
  %v362 = vpop.f32.mrf.mxu0
  %v363 = vadd.f32 0.0, %v362
  %v364 = vpop.f32.mrf.mxu0
  %v365 = vadd.f32 0.0, %v364
  %366 = vmatmul.bf16.gmra.mxu0 %v325
  %v367 = vpop.f32.mrf.mxu0
  %v368 = vadd.f32 0.0, %v367
  %v369 = vpop.f32.mrf.mxu0
  %v370 = vadd.f32 0.0, %v369
  %371 = vmatmul.bf16.gmra.mxu0 %v328
  %v372 = vpop.f32.mrf.mxu0
  %v373 = vadd.f32 0.0, %v372
  %v374 = vpop.f32.mrf.mxu0
  %375 = vdwg.mxu0
  %v376 = vadd.f32 %v227, %v340
  %v377 = vadd.f32 %v250, %v363
  %v378 = vadd.f32 %v229, %v342
  %v379 = vadd.f32 %v252, %v365
  %v380 = vadd.f32 %v232, %v345
  %v381 = vadd.f32 %v255, %v368
  %v382 = vadd.f32 %v234, %v347
  %v383 = vadd.f32 %v257, %v370
  %v384 = vadd.f32 %v237, %v350
  %v385 = vadd.f32 %v260, %v373
  %v387 = vperm.slane %v18, 0
  %v388 = vperm.slane %v18, 1
  %v391 = vmul.f32 %v376, %v387
  %v392 = vmul.f32 %v377, %v388
  %v393 = vmul.f32 %v378, %v387
  %v394 = vmul.f32 %v379, %v388
  %v395 = vmul.f32 %v380, %v387
  %v396 = vmul.f32 %v381, %v388
  %v397 = vmul.f32 %v382, %v387
  %v398 = vmul.f32 %v383, %v388
  %v399 = vmul.f32 %v384, %v387
  %v400 = vmul.f32 %v385, %v388
  %v402 = vperm.slane %v20, 0
  %v403 = vperm.slane %v20, 1
  %v406 = vadd.f32 %v391, %v402
  %v407 = vadd.f32 %v392, %v403
  %v408 = vadd.f32 %v393, %v402
  %v409 = vadd.f32 %v394, %v403
  %v410 = vadd.f32 %v395, %v402
  %v411 = vadd.f32 %v396, %v403
  %v412 = vadd.f32 %v397, %v402
  %v413 = vadd.f32 %v398, %v403
  %v414 = vadd.f32 %v399, %v402
  %v415 = vadd.f32 %v400, %v403
  %v416 = vmax.f32 %v406, 0.0
  %v417 = vmax.f32 %v408, 0.0
  %v418 = vmax.f32 %v410, 0.0
  %v419 = vmax.f32 %v412, 0.0
  %v420 = vmax.f32 %v414, 0.0
  %v421 = vlaneseq
  %v422 = vshrl.u32 %v421, 7
  %v423 = vadd.s32 %v422, 8
  %v424 = vadd.s32 %v422, 16
  %v425 = vadd.s32 %v422, 24
  %v426 = vadd.s32 %v422, 32
  %vm427 = vcmp.ge.s32.totalorder %v422, 1
  %vm428 = vcmp.ge.s32.totalorder %v423, 1
  %vm429 = vcmp.ge.s32.totalorder %v424, 1
  %vm430 = vcmp.ge.s32.totalorder %v425, 1
  %vm431 = vcmp.ge.s32.totalorder %v426, 1
  %vm432 = vcmp.lt.s32.totalorder %v422, 17
  %vm433 = vcmp.lt.s32.totalorder %v423, 17
  %vm434 = vcmp.lt.s32.totalorder %v424, 17
  %vm435 = vcmp.lt.s32.totalorder %v425, 17
  %vm436 = vcmp.lt.s32.totalorder %v426, 17
  %vm437 = vmand %vm427, %vm432
  %vm438 = vmand %vm428, %vm433
  %vm439 = vmand %vm429, %vm434
  %vm440 = vmand %vm430, %vm435
  %vm441 = vmand %vm431, %vm436
  %vm442 = vcmp.ge.s32.totalorder %v422, 19
  %vm443 = vcmp.ge.s32.totalorder %v423, 19
  %vm444 = vcmp.ge.s32.totalorder %v424, 19
  %vm445 = vcmp.ge.s32.totalorder %v425, 19
  %vm446 = vcmp.ge.s32.totalorder %v426, 19
  %vm447 = vcmp.lt.s32.totalorder %v422, 35
  %vm448 = vcmp.lt.s32.totalorder %v423, 35
  %vm449 = vcmp.lt.s32.totalorder %v424, 35
  %vm450 = vcmp.lt.s32.totalorder %v425, 35
  %vm451 = vcmp.lt.s32.totalorder %v426, 35
  %vm452 = vmand %vm442, %vm447
  %vm453 = vmand %vm443, %vm448
  %vm454 = vmand %vm444, %vm449
  %vm455 = vmand %vm445, %vm450
  %vm456 = vmand %vm446, %vm451
  %vm457 = vmor %vm437, %vm452
  %vm458 = vmor %vm438, %vm453
  %vm459 = vmor %vm439, %vm454
  %vm460 = vmor %vm440, %vm455
  %vm461 = vmor %vm441, %vm456
  %v462 = vsel %vm457, 1, 0
  %v463 = vsel %vm458, 1, 0
  %v464 = vsel %vm459, 1, 0
  %v465 = vsel %vm460, 1, 0
  %v466 = vsel %vm461, 1, 0
  %vm467 = vcmp.eq.s32.totalorder %v462, 1
  %vm468 = vcmp.eq.s32.totalorder %v463, 1
  %vm469 = vcmp.eq.s32.totalorder %v464, 1
  %vm470 = vcmp.eq.s32.totalorder %v465, 1
  %vm471 = vcmp.eq.s32.totalorder %v466, 1
  %v472 = vsel %vm467, %v416, 0.0
  %v473 = vsel %vm468, %v417, 0.0
  %v474 = vsel %vm469, %v418, 0.0
  %v475 = vsel %vm470, %v419, 0.0
  %v476 = vsel %vm471, %v420, 0.0
  %v477 = vrot.slane %v472, 7
  %v478 = vrot.slane %v473, 7
  %v479 = vrot.slane %v474, 7
  %v480 = vrot.slane %v475, 7
  %v481 = vrot.slane %v476, 7
  %vm482 = vcmp.lt.s32.totalorder %v422, 1
  %v483 = vsel %vm482, %v480, %v481
  %v484 = vsel %vm482, %v479, %v480
  %v485 = vsel %vm482, %v478, %v479
  %v486 = vsel %vm482, %v477, %v478
  %v487 = vsel %vm482, %v481, %v477
  %v488 = vrot.slane %v472, 1
  %v489 = vrot.slane %v473, 1
  %v490 = vrot.slane %v474, 1
  %v491 = vrot.slane %v475, 1
  %v492 = vrot.slane %v476, 1
  %vm493 = vcmp.lt.s32.totalorder %v422, 7
  %v494 = vsel %vm493, %v491, %v492
  %v495 = vsel %vm493, %v490, %v491
  %v496 = vsel %vm493, %v489, %v490
  %v497 = vsel %vm493, %v488, %v489
  %v498 = vsel %vm493, %v492, %v488
  %v499 = vpack.c.bf16 %v486, %v487
  %v500 = vpack.c.bf16 %v484, %v485
  %v501 = vpack.c.bf16 %v483, %v483
  %v502 = vld [vmem:[%s2] sm:$0xf]
  %v503 = vld [vmem:[%s2 + $0x4] sm:$0xf]
  %v504 = vld [vmem:[%s2 + $0x8] sm:$0xf]
  %v505 = vld [vmem:[%s2 + $0xc] sm:$0xf]
  %v506 = vld [vmem:[%s2 + $0x10] sm:$0xf]
  %v507 = vld [vmem:[%s2 + $0x14] sm:$0xf]
  %v508 = vld [vmem:[%s2 + $0x18] sm:$0xf]
  %v509 = vld [vmem:[%s2 + $0x1c] sm:$0xf]
  %v510 = vld [vmem:[%s2 + $0x20] sm:$0xf]
  %v511 = vld [vmem:[%s2 + $0x24] sm:$0xf]
  %v512 = vld [vmem:[%s2 + $0x28] sm:$0xf]
  %v513 = vld [vmem:[%s2 + $0x2c] sm:$0xf]
  %v514 = vld [vmem:[%s2 + $0x30] sm:$0xf]
  %v515 = vld [vmem:[%s2 + $0x34] sm:$0xf]
  %v516 = vld [vmem:[%s2 + $0x38] sm:$0xf]
  %v517 = vld [vmem:[%s2 + $0x3c] sm:$0xf]
  %v518 = vpack.c.bf16 %v473, %v472
  %v519 = vpack.c.bf16 %v475, %v474
  %v520 = vpack.c.bf16 %v476, %v476
  %s521 = scalar_lea.vmem %s2, 64
  %v522 = vld [vmem:[%s521] sm:$0xf]
  %v523 = vld [vmem:[%s521 + $0x4] sm:$0xf]
  %v524 = vld [vmem:[%s521 + $0x8] sm:$0xf]
  %v525 = vld [vmem:[%s521 + $0xc] sm:$0xf]
  %v526 = vld [vmem:[%s521 + $0x10] sm:$0xf]
  %v527 = vld [vmem:[%s521 + $0x14] sm:$0xf]
  %v528 = vld [vmem:[%s521 + $0x18] sm:$0xf]
  %v529 = vld [vmem:[%s521 + $0x1c] sm:$0xf]
  %v530 = vld [vmem:[%s521 + $0x20] sm:$0xf]
  %v531 = vld [vmem:[%s521 + $0x24] sm:$0xf]
  %v532 = vld [vmem:[%s521 + $0x28] sm:$0xf]
  %v533 = vld [vmem:[%s521 + $0x2c] sm:$0xf]
  %v534 = vld [vmem:[%s521 + $0x30] sm:$0xf]
  %v535 = vld [vmem:[%s521 + $0x34] sm:$0xf]
  %v536 = vld [vmem:[%s521 + $0x38] sm:$0xf]
  %v537 = vld [vmem:[%s521 + $0x3c] sm:$0xf]
  %v554 = vunpack.c.l.b16 %v522
  %v555 = vunpack.c.l.b16 %v523
  %v556 = vunpack.c.l.b16 %v524
  %v557 = vunpack.c.l.b16 %v525
  %v558 = vunpack.c.l.b16 %v526
  %v559 = vunpack.c.l.b16 %v527
  %v560 = vunpack.c.l.b16 %v528
  %v561 = vunpack.c.l.b16 %v529
  %v562 = vunpack.c.l.b16 %v530
  %v563 = vunpack.c.l.b16 %v531
  %v564 = vunpack.c.l.b16 %v532
  %v565 = vunpack.c.l.b16 %v533
  %v566 = vunpack.c.l.b16 %v534
  %v567 = vunpack.c.l.b16 %v535
  %v568 = vunpack.c.l.b16 %v536
  %v569 = vunpack.c.l.b16 %v537
  %v570 = vpack.c.b16 %v555, %v554
  %v571 = vpack.c.b16 %v557, %v556
  %v572 = vpack.c.b16 %v559, %v558
  %v573 = vpack.c.b16 %v561, %v560
  %v574 = vpack.c.b16 %v563, %v562
  %v575 = vpack.c.b16 %v565, %v564
  %v576 = vpack.c.b16 %v567, %v566
  %v577 = vpack.c.b16 %v569, %v568
  %586 = vmatpush.bf16.msra.mxu0 %v577
  %587 = vmatpush.bf16.msra.mxu0 %v576
  %588 = vmatpush.bf16.msra.mxu0 %v575
  %589 = vmatpush.bf16.msra.mxu0 %v574
  %590 = vmatpush.bf16.msra.mxu0 %v573
  %591 = vmatpush.bf16.msra.mxu0 %v572
  %592 = vmatpush.bf16.msra.mxu0 %v571
  %593 = vmatpush.bf16.msra.mxu0 %v570
  %594 = vmatmul.bf16.gmra.mxu0 %v518
  %v595 = vpop.f32.mrf.mxu0
  %v596 = vadd.f32 0.0, %v595
  %v597 = vpop.f32.mrf.mxu0
  %v598 = vadd.f32 0.0, %v597
  %599 = vmatmul.bf16.gmra.mxu0 %v519
  %v600 = vpop.f32.mrf.mxu0
  %v601 = vadd.f32 0.0, %v600
  %v602 = vpop.f32.mrf.mxu0
  %v603 = vadd.f32 0.0, %v602
  %604 = vmatmul.bf16.gmra.mxu0 %v520
  %v605 = vpop.f32.mrf.mxu0
  %v606 = vadd.f32 0.0, %v605
  %v607 = vpop.f32.mrf.mxu0
  %608 = vdwg.mxu0
  %v625 = vunpack.c.l.b16 %v502
  %v626 = vunpack.c.l.b16 %v503
  %v627 = vunpack.c.l.b16 %v504
  %v628 = vunpack.c.l.b16 %v505
  %v629 = vunpack.c.l.b16 %v506
  %v630 = vunpack.c.l.b16 %v507
  %v631 = vunpack.c.l.b16 %v508
  %v632 = vunpack.c.l.b16 %v509
  %v633 = vunpack.c.l.b16 %v510
  %v634 = vunpack.c.l.b16 %v511
  %v635 = vunpack.c.l.b16 %v512
  %v636 = vunpack.c.l.b16 %v513
  %v637 = vunpack.c.l.b16 %v514
  %v638 = vunpack.c.l.b16 %v515
  %v639 = vunpack.c.l.b16 %v516
  %v640 = vunpack.c.l.b16 %v517
  %v641 = vpack.c.b16 %v626, %v625
  %v642 = vpack.c.b16 %v628, %v627
  %v643 = vpack.c.b16 %v630, %v629
  %v644 = vpack.c.b16 %v632, %v631
  %v645 = vpack.c.b16 %v634, %v633
  %v646 = vpack.c.b16 %v636, %v635
  %v647 = vpack.c.b16 %v638, %v637
  %v648 = vpack.c.b16 %v640, %v639
  %657 = vmatpush.bf16.msra.mxu0 %v648
  %658 = vmatpush.bf16.msra.mxu0 %v647
  %659 = vmatpush.bf16.msra.mxu0 %v646
  %660 = vmatpush.bf16.msra.mxu0 %v645
  %661 = vmatpush.bf16.msra.mxu0 %v644
  %662 = vmatpush.bf16.msra.mxu0 %v643
  %663 = vmatpush.bf16.msra.mxu0 %v642
  %664 = vmatpush.bf16.msra.mxu0 %v641
  %665 = vmatmul.bf16.gmra.mxu0 %v499
  %v666 = vpop.f32.mrf.mxu0
  %v667 = vadd.f32 %v596, %v666
  %v668 = vpop.f32.mrf.mxu0
  %v669 = vadd.f32 %v598, %v668
  %670 = vmatmul.bf16.gmra.mxu0 %v500
  %v671 = vpop.f32.mrf.mxu0
  %v672 = vadd.f32 %v601, %v671
  %v673 = vpop.f32.mrf.mxu0
  %v674 = vadd.f32 %v603, %v673
  %675 = vmatmul.bf16.gmra.mxu0 %v501
  %v676 = vpop.f32.mrf.mxu0
  %v677 = vadd.f32 %v606, %v676
  %v678 = vpop.f32.mrf.mxu0
  %679 = vdwg.mxu0
  %v680 = vpack.c.bf16 %v496, %v497
  %v681 = vpack.c.bf16 %v494, %v495
  %v682 = vpack.c.bf16 %v498, %v498
  %s683 = scalar_lea.vmem %s2, 128
  %v684 = vld [vmem:[%s683] sm:$0xf]
  %v685 = vld [vmem:[%s683 + $0x4] sm:$0xf]
  %v686 = vld [vmem:[%s683 + $0x8] sm:$0xf]
  %v687 = vld [vmem:[%s683 + $0xc] sm:$0xf]
  %v688 = vld [vmem:[%s683 + $0x10] sm:$0xf]
  %v689 = vld [vmem:[%s683 + $0x14] sm:$0xf]
  %v690 = vld [vmem:[%s683 + $0x18] sm:$0xf]
  %v691 = vld [vmem:[%s683 + $0x1c] sm:$0xf]
  %v692 = vld [vmem:[%s683 + $0x20] sm:$0xf]
  %v693 = vld [vmem:[%s683 + $0x24] sm:$0xf]
  %v694 = vld [vmem:[%s683 + $0x28] sm:$0xf]
  %v695 = vld [vmem:[%s683 + $0x2c] sm:$0xf]
  %v696 = vld [vmem:[%s683 + $0x30] sm:$0xf]
  %v697 = vld [vmem:[%s683 + $0x34] sm:$0xf]
  %v698 = vld [vmem:[%s683 + $0x38] sm:$0xf]
  %v699 = vld [vmem:[%s683 + $0x3c] sm:$0xf]
  %v716 = vunpack.c.l.b16 %v684
  %v717 = vunpack.c.l.b16 %v685
  %v718 = vunpack.c.l.b16 %v686
  %v719 = vunpack.c.l.b16 %v687
  %v720 = vunpack.c.l.b16 %v688
  %v721 = vunpack.c.l.b16 %v689
  %v722 = vunpack.c.l.b16 %v690
  %v723 = vunpack.c.l.b16 %v691
  %v724 = vunpack.c.l.b16 %v692
  %v725 = vunpack.c.l.b16 %v693
  %v726 = vunpack.c.l.b16 %v694
  %v727 = vunpack.c.l.b16 %v695
  %v728 = vunpack.c.l.b16 %v696
  %v729 = vunpack.c.l.b16 %v697
  %v730 = vunpack.c.l.b16 %v698
  %v731 = vunpack.c.l.b16 %v699
  %v732 = vpack.c.b16 %v717, %v716
  %v733 = vpack.c.b16 %v719, %v718
  %v734 = vpack.c.b16 %v721, %v720
  %v735 = vpack.c.b16 %v723, %v722
  %v736 = vpack.c.b16 %v725, %v724
  %v737 = vpack.c.b16 %v727, %v726
  %v738 = vpack.c.b16 %v729, %v728
  %v739 = vpack.c.b16 %v731, %v730
  %748 = vmatpush.bf16.msra.mxu0 %v739
  %749 = vmatpush.bf16.msra.mxu0 %v738
  %750 = vmatpush.bf16.msra.mxu0 %v737
  %751 = vmatpush.bf16.msra.mxu0 %v736
  %752 = vmatpush.bf16.msra.mxu0 %v735
  %753 = vmatpush.bf16.msra.mxu0 %v734
  %754 = vmatpush.bf16.msra.mxu0 %v733
  %755 = vmatpush.bf16.msra.mxu0 %v732
  %756 = vmatmul.bf16.gmra.mxu0 %v680
  %v757 = vpop.f32.mrf.mxu0
  %v758 = vadd.f32 0.0, %v757
  %v759 = vpop.f32.mrf.mxu0
  %v760 = vadd.f32 0.0, %v759
  %761 = vmatmul.bf16.gmra.mxu0 %v681
  %v762 = vpop.f32.mrf.mxu0
  %v763 = vadd.f32 0.0, %v762
  %v764 = vpop.f32.mrf.mxu0
  %v765 = vadd.f32 0.0, %v764
  %766 = vmatmul.bf16.gmra.mxu0 %v682
  %v767 = vpop.f32.mrf.mxu0
  %v768 = vadd.f32 0.0, %v767
  %v769 = vpop.f32.mrf.mxu0
  %770 = vdwg.mxu0
  %v771 = vadd.f32 %v667, %v758
  %v772 = vadd.f32 %v669, %v760
  %v773 = vadd.f32 %v672, %v763
  %v774 = vadd.f32 %v674, %v765
  %v775 = vadd.f32 %v677, %v768
  %v776 = vmul.f32 %v771, %v21
  %v777 = vmul.f32 %v772, %v21
  %v778 = vmul.f32 %v773, %v21
  %v779 = vmul.f32 %v774, %v21
  %v780 = vmul.f32 %v775, %v21
  %v781 = vadd.f32 %v776, %v22
  %v782 = vadd.f32 %v777, %v22
  %v783 = vadd.f32 %v778, %v22
  %v784 = vadd.f32 %v779, %v22
  %v785 = vadd.f32 %v780, %v22
  %v786 = vadd.f32 %v781, %v407
  %v787 = vadd.f32 %v782, %v409
  %v788 = vadd.f32 %v783, %v411
  %v789 = vadd.f32 %v784, %v413
  %v790 = vadd.f32 %v785, %v415
  %v791 = vmax.f32 %v786, 0.0
  %v792 = vmax.f32 %v787, 0.0
  %v793 = vmax.f32 %v788, 0.0
  %v794 = vmax.f32 %v789, 0.0
  %v795 = vmax.f32 %v790, 0.0
  %796 = vst [vmem:[%s4 - $0x1] sm:$0xfe] %v791
  %797 = vst [vmem:[%s4 + $0x7] sm:$0xff] %v792
  %798 = vst [vmem:[%s4 + $0xf] sm:$0x1] %v793
  %s799 = scalar_lea.vmem %s4, 16
  %800 = vst [vmem:[%s799 - $0x3] sm:$0xf8] %v793
  %801 = vst [vmem:[%s799 + $0x5] sm:$0xff] %v794
  %802 = vst [vmem:[%s799 + $0xd] sm:$0x7] %v795
  // Predicated region
  $region18: #{basic_block_pallas.1} parent=0 // pred_check
    _
  $region19: #{basic_block_pallas.1} parent=0 // pred_check_branch
    %804 = sbr.rel (0) target = $region21
  $region20: #{basic_block_pallas.1} parent=0 // pred_region
    _
  $region21: #{basic_block_pallas.1} parent=0 // pred_fallthru
    _
  // Predicated region
  $region22: #{basic_block_pallas.1} parent=0 // pred_check
    _
  $region23: #{basic_block_pallas.1} parent=0 // pred_check_branch
    %806 = sbr.rel (0) target = $region25
  $region24: #{basic_block_pallas.1} parent=0 // pred_region
    _
  $region25: #{basic_block_pallas.1} parent=0 // pred_fallthru
    _

</llo_original>
